<compile_context>
chip_gen: v5e
topology: v5e:2x2
jax: 0.10.0
libtpu: 0.0.40
codegen_flags: <defaults>
</compile_context>

<pallas_src>
import math

import numpy as np
import jax
import jax.numpy as jnp
from jax.experimental import pallas as pl
from jax.experimental.pallas import tpu as pltpu


# ---------------------------------------------------------------------------
# Parameter construction (deterministic, mirrors the PyTorch __init__)
# ---------------------------------------------------------------------------
def gaussian_kern1d(kernlen=21, nsig=3):
    """Same math as the reference gaussian(); returns the 1-D diff-of-cdf."""
    interval = (2 * nsig + 1.0) / kernlen
    x = np.linspace(-nsig - interval / 2.0, nsig + interval / 2.0, kernlen + 1)
    cdf = np.array([0.5 * (1.0 + math.erf(v / math.sqrt(2.0))) for v in x])
    return np.diff(cdf)


def gaussian(kernlen=21, nsig=3):
    """Full 2-D kernel, identical to the reference (used for the check)."""
    kern1d = gaussian_kern1d(kernlen, nsig)
    kernel_raw = np.sqrt(np.outer(kern1d, kern1d))
    return kernel_raw / kernel_raw.sum()


def gaussian_1d_factor(kernlen=21, nsig=3):
    """Exact rank-1 factor: gaussian(K) == outer(g1, g1)."""
    kern1d = gaussian_kern1d(kernlen, nsig)
    s = np.sqrt(kern1d)
    return (s / s.sum()).astype(np.float32)


def make_blurnet_weight(input_chans=3, kern_sz=11):
    """(Co, Ci, K, K) weight exactly as the PyTorch module builds it."""
    w = np.zeros((input_chans, input_chans, kern_sz, kern_sz), dtype=np.float32)
    blur = gaussian(kern_sz).astype(np.float32)
    for chan in range(min(3, input_chans)):
        w[chan, chan, :, :] = blur
    return jnp.asarray(w)


def _blur_toeplitz(n, g1, pad):
    """Banded Toeplitz T[i, j] = g1[j - i + pad] (zero-padding boundaries)."""
    K = g1.shape[0]
    idx = np.arange(n)
    d = idx[None, :] - idx[:, None] + pad
    t = np.where((d >= 0) & (d < K), g1[np.clip(d, 0, K - 1)], 0.0)
    return t.astype(np.float32)


def _choose_plane_block(M, W):
    """Planes per grid step, chosen so the block's lane width P*W is a
    multiple of 128 (lane-dense, unmasked stores)."""
    if W % 128 == 0:
        return 1                     # each plane is already lane-dense
    if 128 % W == 0:
        base = 128 // W              # minimal P for 128-lane alignment
        # Batch a few alignment units per step (up to ~512 lanes) when there
        # are enough planes, to further amortise per-step pipeline overhead.
        return base * max(1, min(4, M // base))
    # W not 128-aligned: single full-width block (see TODO above).
    return M


# ---------------------------------------------------------------------------
# Pallas kernel: P planes per grid step, two MXU matmuls, one dense store.
# ---------------------------------------------------------------------------
def _blur_block_kernel(tv_ref, twp_ref, x_ref, o_ref):
    # tv_ref : (H, H)     vertical-blur Toeplitz   Tv[h, h'] = g1[h' - h + pad]
    # twp_ref: (PW, PW)   block-diag horizontal-blur Toeplitz kron(I_P, Tw)
    # x_ref  : (H, PW)    P image planes, plane-major along the lane axis
    # o_ref  : (H, PW)
    y = jnp.dot(tv_ref[...], x_ref[...],
                preferred_element_type=jnp.float32)     # vertical pass (MXU)
    z = jnp.dot(y, twp_ref[...],
                preferred_element_type=jnp.float32)     # horizontal pass (MXU)
    o_ref[...] = z.astype(o_ref.dtype)


def blurnet_forward(x, kern_sz=11):
    """Forward pass of BlurNet on an NCHW float tensor."""
    N, C, H, W = x.shape
    K = kern_sz
    pad = K // 2  # matches PyTorch reference for odd kern_sz

    x = x.astype(jnp.float32)
    Cb = min(3, C)  # only the first 3 channels carry the blur; rest are zero

    g1 = gaussian_1d_factor(K)
    tv = _blur_toeplitz(H, g1, pad)          # (H, H): y = Tv @ x
    tw = _blur_toeplitz(W, g1, pad).T        # (W, W): z = y @ Tw

    M = N * Cb
    P = _choose_plane_block(M, W)
    Gp = -(-M // P)                          # grid steps
    Mp = Gp * P                              # planes after padding
    PW = P * W

    # Block-diagonal horizontal operand: applies Tw independently per plane.
    twp = np.kron(np.eye(P, dtype=np.float32), tw)      # (PW, PW)

    # Lane-dense slab: (H, M*W), column group m*W..m*W+W-1 <-> plane m=(n,c).
    xs = jnp.transpose(x[:, :Cb], (2, 0, 1, 3)).reshape(H, M * W)
    if Mp != M:
        xs = jnp.pad(xs, ((0, 0), (0, (Mp - M) * W)))

    # VMEM budget: double-buffered Tv/TwP/x/o blocks + the (H, PW) intermediate.
    need = 4 * (2 * H * H + 2 * PW * PW + 6 * H * PW)
    vmem_limit = int(min(64 * 1024 * 1024, max(16 * 1024 * 1024, 2 * need)))

    out = pl.pallas_call(
        _blur_block_kernel,
        out_shape=jax.ShapeDtypeStruct((H, Mp * W), jnp.float32),
        grid=(Gp,),
        in_specs=[
            pl.BlockSpec((H, H), lambda g: (0, 0)),     # Tv: resident
            pl.BlockSpec((PW, PW), lambda g: (0, 0)),   # TwP: resident
            pl.BlockSpec((H, PW), lambda g: (0, g)),    # P planes / step
        ],
        out_specs=pl.BlockSpec((H, PW), lambda g: (0, g)),
        compiler_params=pltpu.CompilerParams(
            dimension_semantics=("parallel",),
            vmem_limit_bytes=vmem_limit),
    )(jnp.asarray(tv), jnp.asarray(twp), xs)

    out = out[:, :M * W].reshape(H, M, W)
    out = jnp.transpose(out, (1, 0, 2)).reshape(N, Cb, H, W)
    if C > Cb:
        # Reference output channels >= 3 are exactly zero (zero conv weights).
        out = jnp.concatenate(
            [out, jnp.zeros((N, C - Cb, H, W), out.dtype)], axis=1)
    return out


# ---------------------------------------------------------------------------
if __name__ == "__main__":
    key = jax.random.PRNGKey(0)
    N, C, H, W = 2, 4, 16, 16
    kern_sz = 11

    x = jax.random.normal(key, (N, C, H, W), dtype=jnp.float32)

    y = blurnet_forward(x, kern_sz=kern_sz)
    y = jax.block_until_ready(y)

    # Reference check against XLA's conv with the exact PyTorch-style weight.
    weight = make_blurnet_weight(input_chans=C, kern_sz=kern_sz)
    y_ref = jax.lax.conv_general_dilated(
        x, weight,
        window_strides=(1, 1),
        padding=[(kern_sz // 2, kern_sz // 2)] * 2,
        dimension_numbers=("NCHW", "OIHW", "NCHW"),
    )
    assert y.shape == (N, C, H, W)
    assert jnp.allclose(y, y_ref, atol=1e-4), float(jnp.max(jnp.abs(y - y_ref)))

    print("KERNEL_OK")
</pallas_src>

<mosaic_0001>
module attributes {stable_mosaic.version = 11 : i64} {
  func.func @_blur_block_kernel(%arg0: i32, %arg1: memref<16x16xf32, #tpu.memory_space<vmem>>, %arg2: memref<128x128xf32, #tpu.memory_space<vmem>>, %arg3: memref<16x128xf32, #tpu.memory_space<vmem>>, %arg4: memref<16x128xf32, #tpu.memory_space<vmem>>) attributes {dimension_semantics = [#tpu.dimension_semantics<parallel>], iteration_bounds = array<i64: 1>, scalar_prefetch = 0 : i64, scratch_operands = 0 : i64, tpu.core_type = #tpu.core_type<tc>, window_params = [{pipeline_mode = #tpu.pipeline_mode<synchronous>, transform_indices = @transform_0, window_bounds = array<i64: 16, 16>}, {pipeline_mode = #tpu.pipeline_mode<synchronous>, transform_indices = @transform_1, window_bounds = array<i64: 128, 128>}, {transform_indices = @transform_2, window_bounds = array<i64: 16, 128>}, {transform_indices = @transform_3, window_bounds = array<i64: 16, 128>}]} {
    %c0 = arith.constant 0 : index
    %c0_0 = arith.constant 0 : index
    %0 = vector.load %arg1[%c0, %c0_0] : memref<16x16xf32, #tpu.memory_space<vmem>>, vector<16x16xf32>
    %c0_1 = arith.constant 0 : index
    %c0_2 = arith.constant 0 : index
    %1 = vector.load %arg3[%c0_1, %c0_2] : memref<16x128xf32, #tpu.memory_space<vmem>>, vector<16x128xf32>
    %cst = arith.constant dense<0.000000e+00> : vector<16x128xf32>
    %2 = tpu.matmul %0, %1, %cst {dimension_numbers = #tpu.dot_dimension_numbers<[1], [0], [0], [1], [0, 0, 1, 1], [], []>} : vector<16x16xf32>, vector<16x128xf32>, vector<16x128xf32> -> vector<16x128xf32>
    %c0_3 = arith.constant 0 : index
    %c0_4 = arith.constant 0 : index
    %3 = vector.load %arg2[%c0_3, %c0_4] : memref<128x128xf32, #tpu.memory_space<vmem>>, vector<128x128xf32>
    %cst_5 = arith.constant dense<0.000000e+00> : vector<16x128xf32>
    %4 = tpu.matmul %2, %3, %cst_5 {dimension_numbers = #tpu.dot_dimension_numbers<[1], [0], [0], [1], [0, 0, 1, 1], [], []>} : vector<16x128xf32>, vector<128x128xf32>, vector<16x128xf32> -> vector<16x128xf32>
    %c0_6 = arith.constant 0 : index
    %c0_7 = arith.constant 0 : index
    %5 = vector.load %arg4[%c0_6, %c0_7] : memref<16x128xf32, #tpu.memory_space<vmem>>, vector<16x128xf32>
    tpu.vector_store %arg4[%c0_6, %c0_7], %4 {strides = array<i32>} : memref<16x128xf32, #tpu.memory_space<vmem>>, vector<16x128xf32>,
    return
  }
  func.func @transform_0(%arg0: i32) -> (i32, i32) {
    %c0_i32 = arith.constant 0 : i32
    %c0_i32_0 = arith.constant 0 : i32
    %c0_i32_1 = arith.constant 0 : i32
    return %c0_i32, %c0_i32_0 : i32, i32
  }
  func.func @transform_1(%arg0: i32) -> (i32, i32) {
    %c0_i32 = arith.constant 0 : i32
    %c0_i32_0 = arith.constant 0 : i32
    %c0_i32_1 = arith.constant 0 : i32
    return %c0_i32, %c0_i32_0 : i32, i32
  }
  func.func @transform_2(%arg0: i32) -> (i32, i32) {
    %c0_i32 = arith.constant 0 : i32
    %c0_i32_0 = arith.constant 0 : i32
    return %c0_i32, %arg0 : i32, i32
  }
  func.func @transform_3(%arg0: i32) -> (i32, i32) {
    %c0_i32 = arith.constant 0 : i32
    %c0_i32_0 = arith.constant 0 : i32
    return %c0_i32, %arg0 : i32, i32
  }
}

</mosaic_0001>

<llo_original>
// kernel: tpu_custom_call.1
$region0: #{tpu_custom_call.1}
  #allocation0 [shape = 'u32[]', space=smem, size = 0x4, offset = 0x4, fixed_abs, tag = 'smem constant byte address 0x4 - core index']
  #allocation1 [shape = 'u32[72,128]{1,0:T(1,128)}', space=vmem, size = 0x9000, scoped, tag = 'internal scratch']
  %s0 = inlined_call_operand.hbm [shape: f32[16,16], index: 0, kind: input, shape index: {}]
  %s1 = inlined_call_operand.hbm [shape: f32[128,128], index: 1, kind: input, shape index: {}]
  %s2 = inlined_call_operand.hbm [shape: f32[16,128], index: 2, kind: input, shape index: {}]
  %s3 = inlined_call_operand.hbm [shape: f32[16,128], index: 3, kind: output, shape index: {}]
  %s4 = sld [smem:[#allocation0]]
  $region34: #{tpu_custom_call.1} parent=0
    _
  %s6 = ssub.s32 1, %s4
  %s7 = scalar_select 0, %s6, %s4
  $region1: #{tpu_custom_call.1} parent=0
    #allocation2 [shape = 'u8[8192]{0}', space=vmem, size = 0x2000, scoped, tag = 'input window, operand 0, single buffered']
    #allocation3 [shape = 's32[1]{0}', space=sflag, size = 0x4, scoped, tag = 'scoped memory for tpu_custom_call.1']
    #allocation4 [shape = 's32[1]{0}', space=sflag, size = 0x4, scoped, tag = 'scoped memory for tpu_custom_call.1']
    #allocation5 [shape = 'u8[65536]{0}', space=vmem, size = 0x10000, scoped, tag = 'input window, operand 1, single buffered']
    #allocation6 [shape = 's32[1]{0}', space=sflag, size = 0x4, scoped, tag = 'scoped memory for tpu_custom_call.1']
    #allocation7 [shape = 'u8[8192]{0}', space=vmem, size = 0x2000, scoped, tag = 'input window, operand 2, single buffered']
    #allocation8 [shape = 'u8[8192]{0}', space=vmem, size = 0x2000, scoped, tag = 'output window, operand 0, single buffered']
    %8 = vsyncpa [#allocation3], 0
    %9 = vsyncpa [#allocation6], 0
    %10 = vsyncpa [#allocation4], 0
    // Predicated region
    $region2: #{tpu_custom_call.1} parent=1 // pred_check
      _
    $region3: #{tpu_custom_call.1} parent=1 // pred_check_branch
      %12 = sbr.rel (0) target = $region5
    $region4: #{tpu_custom_call.1} parent=1 // pred_region
      %14 = vsyncadd [#allocation3], 0
      %s15 = sshll.u32 %s0, 4
      %s16 = int_to_ptr.hbm [resolvable:$true] %s15
      %s17 = sshll.u32 [#allocation2], 4
      %s18 = int_to_ptr.vmem [resolvable:$true] %s17
      %23 = dma.hbm_to_vmem [thread:$0]  %s16, 256, %s18, [#allocation3], 128, 128, 8
    $region5: #{tpu_custom_call.1} parent=1 // pred_fallthru
      _
    // Predicated region
    $region6: #{tpu_custom_call.1} parent=1 // pred_check
      _
    $region7: #{tpu_custom_call.1} parent=1 // pred_check_branch
      %25 = sbr.rel (0) target = $region9
    $region8: #{tpu_custom_call.1} parent=1 // pred_region
      %27 = vsyncadd [#allocation6], 0
      %s28 = sshll.u32 %s1, 4
      %s29 = int_to_ptr.hbm [resolvable:$true] %s28
      %s30 = sshll.u32 [#allocation5], 4
      %s31 = int_to_ptr.vmem [resolvable:$true] %s30
      %36 = dma.hbm_to_vmem [thread:$0]  %s29, 2048, %s31, [#allocation6], 128, 128, 8
    $region9: #{tpu_custom_call.1} parent=1 // pred_fallthru
      _
    // Predicated region
    $region10: #{tpu_custom_call.1} parent=1 // pred_check
      _
    $region11: #{tpu_custom_call.1} parent=1 // pred_check_branch
      %38 = sbr.rel (0) target = $region13
    $region12: #{tpu_custom_call.1} parent=1 // pred_region
      %40 = vsyncadd [#allocation6], 0
      %s41 = sshll.u32 %s2, 4
      %s42 = int_to_ptr.hbm [resolvable:$true] %s41
      %s43 = sshll.u32 [#allocation7], 4
      %s44 = int_to_ptr.vmem [resolvable:$true] %s43
      %49 = dma.hbm_to_vmem [thread:$0]  %s42, 256, %s44, [#allocation6], 128, 128, 8
    $region13: #{tpu_custom_call.1} parent=1 // pred_fallthru
      _
    // Predicated region
    $region14: #{tpu_custom_call.1} parent=1 // pred_check
      _
    $region15: #{tpu_custom_call.1} parent=1 // pred_check_branch
      %51 = sbr.rel (0) target = $region17
    $region16: #{tpu_custom_call.1} parent=1 // pred_region
      %53 = dma.done [#allocation3], 256
    $region17: #{tpu_custom_call.1} parent=1 // pred_fallthru
      _
    // Predicated region
    $region18: #{tpu_custom_call.1} parent=1 // pred_check
      _
    $region19: #{tpu_custom_call.1} parent=1 // pred_check_branch
      %55 = sbr.rel (0) target = $region21
    $region20: #{tpu_custom_call.1} parent=1 // pred_region
      %57 = dma.done [#allocation6], 2048
    $region21: #{tpu_custom_call.1} parent=1 // pred_fallthru
      _
    // Predicated region
    $region22: #{tpu_custom_call.1} parent=1 // pred_check
      _
    $region23: #{tpu_custom_call.1} parent=1 // pred_check_branch
      %59 = sbr.rel (0) target = $region25
    $region24: #{tpu_custom_call.1} parent=1 // pred_region
      %61 = dma.done [#allocation6], 256
    $region25: #{tpu_custom_call.1} parent=1 // pred_fallthru
      _
    %v62 = vld [vmem:[#allocation2] sm:$0xff]
    %v63 = vld [vmem:[#allocation2 + $0x8] sm:$0xff]
    %v64 = vld [vmem:[#allocation7] sm:$0xff]
    %v65 = vld [vmem:[#allocation7 + $0x8] sm:$0xff]
    %vm66 = vcmask 130048
    %v68 = vsel %vm66, %v62, 0
    %v71 = vsel %vm66, %v63, 0
    %73 = vmatpush.msra.mxu0 0.0
    %74 = vmatpush.msra.mxu0 0.0
    %75 = vmatpush.msra.mxu0 0.0
    %76 = vmatpush.msra.mxu0 0.0
    %77 = vmatpush.msra.mxu0 0.0
    %78 = vmatpush.msra.mxu0 0.0
    %79 = vmatpush.msra.mxu0 0.0
    %80 = vmatpush.msra.mxu0 0.0
    %81 = vmatpush.msra.mxu0 0.0
    %82 = vmatpush.msra.mxu0 0.0
    %83 = vmatpush.msra.mxu0 0.0
    %84 = vmatpush.msra.mxu0 0.0
    %85 = vmatpush.msra.mxu0 0.0
    %86 = vmatpush.msra.mxu0 0.0
    %87 = vmatpush.msra.mxu0 %v65
    %88 = vmatpush.msra.mxu0 %v64
    %89 = vmatmul.f32.gmra.mxu0 %v68
    %v90 = vpop.f32.mrf.mxu0
    %v91 = vadd.f32 0.0, %v90
    %92 = vmatmul.f32.gmra.mxu0 %v71
    %v93 = vpop.f32.mrf.mxu0
    %v94 = vadd.f32 0.0, %v93
    %95 = vdwg.mxu0
    %v96 = vld [vmem:[#allocation5] sm:$0xff]
    %v97 = vld [vmem:[#allocation5 + $0x8] sm:$0xff]
    %v98 = vld [vmem:[#allocation5 + $0x10] sm:$0xff]
    %v99 = vld [vmem:[#allocation5 + $0x18] sm:$0xff]
    %v100 = vld [vmem:[#allocation5 + $0x20] sm:$0xff]
    %v101 = vld [vmem:[#allocation5 + $0x28] sm:$0xff]
    %v102 = vld [vmem:[#allocation5 + $0x30] sm:$0xff]
    %v103 = vld [vmem:[#allocation5 + $0x38] sm:$0xff]
    %v104 = vld [vmem:[#allocation5 + $0x40] sm:$0xff]
    %v105 = vld [vmem:[#allocation5 + $0x48] sm:$0xff]
    %v106 = vld [vmem:[#allocation5 + $0x50] sm:$0xff]
    %v107 = vld [vmem:[#allocation5 + $0x58] sm:$0xff]
    %v108 = vld [vmem:[#allocation5 + $0x60] sm:$0xff]
    %v109 = vld [vmem:[#allocation5 + $0x68] sm:$0xff]
    %v110 = vld [vmem:[#allocation5 + $0x70] sm:$0xff]
    %v111 = vld [vmem:[#allocation5 + $0x78] sm:$0xff]
    %112 = vmatpush.msra.mxu0 %v111
    %113 = vmatpush.msra.mxu0 %v110
    %114 = vmatpush.msra.mxu0 %v109
    %115 = vmatpush.msra.mxu0 %v108
    %116 = vmatpush.msra.mxu0 %v107
    %117 = vmatpush.msra.mxu0 %v106
    %118 = vmatpush.msra.mxu0 %v105
    %119 = vmatpush.msra.mxu0 %v104
    %120 = vmatpush.msra.mxu0 %v103
    %121 = vmatpush.msra.mxu0 %v102
    %122 = vmatpush.msra.mxu0 %v101
    %123 = vmatpush.msra.mxu0 %v100
    %124 = vmatpush.msra.mxu0 %v99
    %125 = vmatpush.msra.mxu0 %v98
    %126 = vmatpush.msra.mxu0 %v97
    %127 = vmatpush.msra.mxu0 %v96
    %128 = vmatmul.f32.gmra.mxu0 %v91
    %v129 = vpop.f32.mrf.mxu0
    %v130 = vadd.f32 0.0, %v129
    %131 = vmatmul.f32.gmra.mxu0 %v94
    %v132 = vpop.f32.mrf.mxu0
    %v133 = vadd.f32 0.0, %v132
    %134 = vdwg.mxu0
    %135 = vst [vmem:[#allocation8] sm:$0xff] %v130
    %136 = vst [vmem:[#allocation8 + $0x8] sm:$0xff] %v133
    // Predicated region
    $region26: #{tpu_custom_call.1} parent=1 // pred_check
      _
    $region27: #{tpu_custom_call.1} parent=1 // pred_check_branch
      %138 = sbr.rel (0) target = $region29
    $region28: #{tpu_custom_call.1} parent=1 // pred_region
      %140 = vsyncadd [#allocation4], 0
      %s141 = sshll.u32 [#allocation8], 4
      %s142 = int_to_ptr.vmem [resolvable:$true] %s141
      %s143 = sshll.u32 %s3, 4
      %s144 = int_to_ptr.hbm [resolvable:$true] %s143
      %149 = dma.vmem_to_hbm [thread:$0]  %s142, 256, %s144, [#allocation4], 128, 128, 8
    $region29: #{tpu_custom_call.1} parent=1 // pred_fallthru
      _
    // Predicated region
    $region30: #{tpu_custom_call.1} parent=1 // pred_check
      _
    $region31: #{tpu_custom_call.1} parent=1 // pred_check_branch
      %151 = sbr.rel (0) target = $region33
    $region32: #{tpu_custom_call.1} parent=1 // pred_region
      %153 = dma.done [#allocation4], 256
    $region33: #{tpu_custom_call.1} parent=1 // pred_fallthru
      _
    %154 = vsyncpa [#allocation3], 1
    %155 = vsyncpa [#allocation6], 1
    %156 = vsyncpa [#allocation4], 1

</llo_original>
